<compile_context>
chip_gen: v7x
topology: tpu7x:2x2x1
jax: 0.10.0
libtpu: 0.0.40
codegen_flags: <defaults>
</compile_context>

<pallas_src>
import functools

import jax
import jax.numpy as jnp
from jax import lax
from jax.experimental import pallas as pl
from jax.experimental.pallas import tpu as pltpu


def _cdiv(a, b):
    return -(-a // b)


# ----------------------------------------------------------------------------
# Kernels
# ----------------------------------------------------------------------------
def _patch_embed_kernel(x_ref, o_ref):
    """norm_layer=None path: pure flatten(2).transpose(1, 2).

    x_ref: (1, C, TL)  channel-major, lane-dense (TL multiple of 128)
    o_ref: (1, TL, C)
    """
    o_ref[0] = x_ref[0].T.astype(o_ref.dtype)


def _patch_embed_norm_kernel(x_ref, g_ref, b_ref, o_ref, *, eps):
    """flatten + transpose + LayerNorm(embed_dim), fused.

    Stats are computed in ONE pass (var = E[x^2] - mean^2, f32 accumulation)
    in the channel-major (C, TL) layout: lane-dense VPU work, sublane
    reductions, rsqrt on the EUP.  The single XLU transpose is deferred to
    just before the store.

    x_ref: (1, C, TL)   g_ref / b_ref: (C, 1)   o_ref: (1, TL, C)
    """
    x = x_ref[0].astype(jnp.float32)                       # (C, TL)
    c_inv = jnp.float32(1.0 / x.shape[0])
    mean = jnp.sum(x, axis=0, keepdims=True) * c_inv       # (1, TL)
    mean_sq = jnp.sum(x * x, axis=0, keepdims=True) * c_inv
    var = mean_sq - mean * mean                            # biased, as torch
    inv = lax.rsqrt(var + eps)                             # (1, TL), EUP
    g = g_ref[...].astype(jnp.float32)                     # (C, 1)
    b = b_ref[...].astype(jnp.float32)                     # (C, 1)
    y = (x - mean) * inv * g + b                           # (C, TL)
    o_ref[0] = y.T.astype(o_ref.dtype)


# ----------------------------------------------------------------------------
# Tiling / VMEM budgeting
# ----------------------------------------------------------------------------
def _choose_tiling(L, C, itemsize, with_norm):
    """Pick a fixed lane-dense L tile sized against the full per-step VMEM
    footprint, plus a matching scoped-VMEM limit.

    Per-step live VMEM per column of the tile:
      2x input block + 2x output block (Pallas double-buffers both) and,
      on the norm path, ~2 block-sized f32 temporaries.
    """
    per_col = C * (4 * itemsize + (8 if with_norm else itemsize))
    if L <= 128:
        tl = L  # single block equal to the full (non-lane-dense) extent
    else:
        block_budget = 6 << 20  # per-step target, safe on v5e/v6e/v7x
        tl = max(128, (block_budget // per_col) // 128 * 128)
        tl = min(tl, _cdiv(L, 128) * 128)
        # Guarantee >=2 grid steps along L so the megacore (v7x: 2 TCs) can
        # shard and the DMA pipeline has something to overlap, even at B=1.
        while _cdiv(L, tl) < 2 and tl > 128:
            tl -= 128
    footprint = tl * per_col
    vmem_limit = int(min(max(2 * footprint + (4 << 20), 20 << 20), 48 << 20))
    return tl, vmem_limit


# ----------------------------------------------------------------------------
# Wrapper
# ----------------------------------------------------------------------------
def patch_embed_forward(x, norm=None, *, eps=1e-5):
    """PatchEmbed.forward: (B, C, H, W) -> (B, H*W, C), optional LayerNorm(C).

    norm: None (module default norm_layer=None) or a dict with 'gamma' and
          'beta' of shape (C,) for the nn.LayerNorm(embed_dim) variant.
    """
    B, C, H, W = x.shape
    L = H * W
    # Metadata-only reshape of a contiguous NCHW array (no HBM pass).
    x2 = x.reshape(B, C, L)

    itemsize = x.dtype.itemsize
    tl, vmem_limit = _choose_tiling(L, C, itemsize, norm is not None)
    grid = (B, _cdiv(L, tl))  # ragged last L block handled by Pallas

    out_shape = jax.ShapeDtypeStruct((B, L, C), x.dtype)
    x_spec = pl.BlockSpec((1, C, tl), lambda b, l: (b, 0, l))
    out_spec = pl.BlockSpec((1, tl, C), lambda b, l: (b, l, 0))
    cparams = pltpu.CompilerParams(
        dimension_semantics=("parallel", "parallel"),
        vmem_limit_bytes=vmem_limit,
    )
    bytes_accessed = 2 * B * L * C * itemsize

    if norm is None:
        cost = pl.CostEstimate(
            flops=0, transcendentals=0, bytes_accessed=bytes_accessed
        )
        return pl.pallas_call(
            _patch_embed_kernel,
            out_shape=out_shape,
            grid_spec=pltpu.PrefetchScalarGridSpec(
                num_scalar_prefetch=0,
                grid=grid,
                in_specs=[x_spec],
                out_specs=out_spec,
            ),
            compiler_params=cparams,
            cost_estimate=cost,
        )(x2)

    gamma = norm["gamma"].reshape(C, 1)
    beta = norm["beta"].reshape(C, 1)
    cost = pl.CostEstimate(
        flops=7 * B * L * C, transcendentals=B * L, bytes_accessed=bytes_accessed
    )
    kernel = functools.partial(_patch_embed_norm_kernel, eps=eps)
    return pl.pallas_call(
        kernel,
        out_shape=out_shape,
        grid_spec=pltpu.PrefetchScalarGridSpec(
            num_scalar_prefetch=0,
            grid=grid,
            in_specs=[
                x_spec,
                pl.BlockSpec((C, 1), lambda b, l: (0, 0)),
                pl.BlockSpec((C, 1), lambda b, l: (0, 0)),
            ],
            out_specs=out_spec,
        ),
        compiler_params=cparams,
        cost_estimate=cost,
    )(x2, gamma, beta)


# ----------------------------------------------------------------------------
# Pure-JAX reference (PyTorch semantics)
# ----------------------------------------------------------------------------
def _reference_forward(x, norm=None, eps=1e-5):
    B, C, H, W = x.shape
    y = jnp.transpose(x.reshape(B, C, H * W), (0, 2, 1))  # flatten(2).transpose
    if norm is not None:
        mean = jnp.mean(y, axis=-1, keepdims=True)
        var = jnp.mean((y - mean) ** 2, axis=-1, keepdims=True)
        y = (y - mean) / jnp.sqrt(var + eps)
        y = y * norm["gamma"] + norm["beta"]
    return y


if __name__ == "__main__":
    key = jax.random.PRNGKey(0)
    kx, kg, kb, kx2 = jax.random.split(key, 4)

    # PatchEmbed.forward receives an NCHW feature map whose channel count is
    # the embed_dim (module default 96); keep spatial small.
    B, C, H, W = 2, 96, 16, 16
    x = jax.random.normal(kx, (B, C, H, W), dtype=jnp.float32)

    fwd = jax.jit(patch_embed_forward)

    # Default path (norm_layer=None): pure flatten(2).transpose(1, 2).
    out = jax.block_until_ready(fwd(x))
    ref = _reference_forward(x)
    assert out.shape == (B, H * W, C), out.shape
    assert jnp.allclose(out, ref, atol=1e-5, rtol=1e-5), "mismatch (no norm)"

    # Optional norm_layer=nn.LayerNorm(embed_dim) path, fused in-kernel.
    norm = {
        "gamma": 1.0 + 0.1 * jax.random.normal(kg, (C,), jnp.float32),
        "beta": 0.1 * jax.random.normal(kb, (C,), jnp.float32),
    }
    out_n = jax.block_until_ready(fwd(x, norm))
    ref_n = _reference_forward(x, norm)
    assert out_n.shape == (B, H * W, C), out_n.shape
    assert jnp.allclose(out_n, ref_n, atol=1e-4, rtol=1e-4), "mismatch (norm)"

    # Ragged spatial extent: L = 400 is not a multiple of 128, exercising the
    # cdiv-based grid and boundary-block handling.
    H2 = W2 = 20
    x_r = jax.random.normal(kx2, (B, C, H2, W2), dtype=jnp.float32)
    out_r = jax.block_until_ready(fwd(x_r, norm))
    ref_r = _reference_forward(x_r, norm)
    assert out_r.shape == (B, H2 * W2, C), out_r.shape
    assert jnp.allclose(out_r, ref_r, atol=1e-4, rtol=1e-4), "mismatch (ragged)"

    print("KERNEL_OK")
</pallas_src>

<mosaic_0001>
module attributes {stable_mosaic.version = 11 : i64} {
  func.func @_patch_embed_kernel(%arg0: i32, %arg1: i32, %arg2: memref<1x96x128xf32, #tpu.memory_space<vmem>>, %arg3: memref<1x128x96xf32, #tpu.memory_space<vmem>>) attributes {dimension_semantics = [#tpu.dimension_semantics<parallel>, #tpu.dimension_semantics<parallel>], iteration_bounds = array<i64: 2, 2>, scalar_prefetch = 0 : i64, scratch_operands = 0 : i64, tpu.core_type = #tpu.core_type<tc>, window_params = [{transform_indices = @transform_0, window_bounds = array<i64: 1, 96, 128>}, {transform_indices = @transform_1, window_bounds = array<i64: 1, 128, 96>}]} {
    %c0 = arith.constant 0 : index
    %c0_0 = arith.constant 0 : index
    %c0_1 = arith.constant 0 : index
    %0 = vector.load %arg2[%c0, %c0_0, %c0_1] : memref<1x96x128xf32, #tpu.memory_space<vmem>>, vector<1x96x128xf32>
    %1 = vector.shape_cast %0 : vector<1x96x128xf32> to vector<96x128xf32>
    %2 = tpu.transpose %1, [1, 0] : vector<96x128xf32> -> vector<128x96xf32>
    %c0_2 = arith.constant 0 : index
    %c0_3 = arith.constant 0 : index
    %c0_4 = arith.constant 0 : index
    %3 = vector.load %arg3[%c0_2, %c0_3, %c0_4] : memref<1x128x96xf32, #tpu.memory_space<vmem>>, vector<1x128x96xf32>
    %4 = vector.shape_cast %3 : vector<1x128x96xf32> to vector<128x96xf32>
    %5 = vector.shape_cast %2 : vector<128x96xf32> to vector<1x128x96xf32>
    tpu.vector_store %arg3[%c0_2, %c0_3, %c0_4], %5 {strides = array<i32>} : memref<1x128x96xf32, #tpu.memory_space<vmem>>, vector<1x128x96xf32>,
    return
  }
  func.func @transform_0(%arg0: i32, %arg1: i32) -> (i32, i32, i32) {
    %c0_i32 = arith.constant 0 : i32
    %c0_i32_0 = arith.constant 0 : i32
    return %arg0, %c0_i32, %arg1 : i32, i32, i32
  }
  func.func @transform_1(%arg0: i32, %arg1: i32) -> (i32, i32, i32) {
    %c0_i32 = arith.constant 0 : i32
    %c0_i32_0 = arith.constant 0 : i32
    return %arg0, %arg1, %c0_i32 : i32, i32, i32
  }
}

</mosaic_0001>

<llo_original>
// kernel: patch_embed_forward.1
$region0: #{patch_embed_forward.1}
  #allocation0 [shape = 'u32[]', space=smem, size = 0x4, offset = 0x4, fixed_abs, tag = 'smem constant byte address 0x4 - core index']
  #allocation1 [shape = 'u32[144,128]{1,0:T(1,128)}', space=vmem, size = 0x12000, scoped, tag = 'internal scratch']
  %s0 = inlined_call_operand.vmem [shape: f32[2,96,256], index: 0, kind: input, shape index: {}]
  %s1 = inlined_call_operand.vmem [shape: f32[2,256,96], index: 1, kind: output, shape index: {}]
  %s2 = sld [smem:[#allocation0]]
  $region75: #{patch_embed_forward.1} parent=0
    _
  %s4 = ssub.s32 1, %s2
  %s5 = scalar_select 0, %s4, %s2
  $region1: #{patch_embed_forward.1} parent=0
    #allocation2 [shape = 'u8[98304]{0}', space=vmem, size = 0x18000, scoped, tag = 'input window, operand 0']
    loop: start=0, step=1, limit=6
    $region2: #{patch_embed_forward.1} parent=1 // loop_pre_header
      _
    $region3: #{patch_embed_forward.1} parent=1 // loop_header
      %s7 = sphi 0, %s11
      %p8 = scmp.ge.s32.totalorder %s7, 6
      %s14 = sphi 0, %s26
      %s15 = sphi 0, %s22
      %s16 = sphi 0, %s14
      %s17 = sphi 0, %s15
      %s18 = sphi 0, %s16
      %s19 = sphi 0, %s17
      %s31 = sphi 0, %s33
      %s34 = sphi 0, %s31
      %s35 = sphi 0, %s34
      %s51 = sphi 0, %s35
      %s59 = sphi 0, %s61
      %s62 = sphi 0, %s59
      %s63 = sphi 0, %s62
      %s79 = sphi 0, %s63
    $region4: #{patch_embed_forward.1} parent=1 // loop_header_branch
      %10 = sbr.rel (%p8) target = $region8
    $region5: #{patch_embed_forward.1} parent=1 // loop_body
      %s12 = ssub.s32 %s7, 1
      %s13 = ssub.s32 %s7, 2
      %s20 = sadd.s32 1, %s15
      %p21 = scmp.ge.s32.totalorder %s20, 2
      %s22 = scalar_select %p21, 0, %s20
      %s23 = sadd.s32 1, %s14
      %s24 = scalar_select %p21, %s23, %s14
      %p25 = scmp.ge.s32.totalorder %s24, 2
      %s26 = scalar_select %p25, 0, %s24
      %s27 = ssub.s32 %s14, %s26
      %s28 = ssub.s32 %s15, %s22
      %s29 = sor.u32 %s27, %s28
      %p30 = scmp.eq.s32.totalorder %s29, 0
      %s32 = sadd.s32 %s31, 1
      %s33 = scalar_select %p30, %s31, %s32
      %p36 = pneg %p30
      %p37 = scmp.eq.s32.totalorder %s7, 3
      %p38 = por %p36, %p37
      %p39 = scmp.ne.s32.totalorder %s31, %s34
      %p40 = scmp.eq.s32.totalorder %s7, 0
      %p41 = por %p39, %p40
      %p42 = scmp.ne.s32.totalorder %s31, %s34
      %p43 = scmp.eq.s32.totalorder %s12, 3
      %p44 = por %p42, %p43
      %p45 = scmp.ne.s32.totalorder %s34, %s35
      %p46 = scmp.eq.s32.totalorder %s12, 0
      %p47 = por %p45, %p46
      %p48 = scmp.ne.s32.totalorder %s34, %s35
      %p49 = scmp.eq.s32.totalorder %s13, 3
      %p50 = por %p48, %p49
      %p52 = scmp.ne.s32.totalorder %s35, %s51
      %p53 = scmp.eq.s32.totalorder %s13, 0
      %p54 = por %p52, %p53
      %s55 = ssub.s32 %s14, %s26
      %s56 = ssub.s32 %s15, %s22
      %s57 = sor.u32 %s55, %s56
      %p58 = scmp.eq.s32.totalorder %s57, 0
      %s60 = sadd.s32 %s59, 1
      %s61 = scalar_select %p58, %s59, %s60
      %p64 = pneg %p58
      %p65 = scmp.eq.s32.totalorder %s7, 3
      %p66 = por %p64, %p65
      %p67 = scmp.ne.s32.totalorder %s59, %s62
      %p68 = scmp.eq.s32.totalorder %s7, 0
      %p69 = por %p67, %p68
      %p70 = scmp.ne.s32.totalorder %s59, %s62
      %p71 = scmp.eq.s32.totalorder %s12, 3
      %p72 = por %p70, %p71
      %p73 = scmp.ne.s32.totalorder %s62, %s63
      %p74 = scmp.eq.s32.totalorder %s12, 0
      %p75 = por %p73, %p74
      %p76 = scmp.ne.s32.totalorder %s62, %s63
      %p77 = scmp.eq.s32.totalorder %s13, 3
      %p78 = por %p76, %p77
      %p80 = scmp.ne.s32.totalorder %s63, %s79
      %p81 = scmp.eq.s32.totalorder %s13, 0
      %p82 = por %p80, %p81
      %p83 = scmp.le.s32.totalorder 1, %s7
      %p84 = scmp.lt.s32.totalorder %s7, 5
      %p85 = pnand %p83, %p84
      %p86 = pneg %p85
      // Predicated region
      $region9: #{patch_embed_forward.1} parent=5 // pred_check
        _
      $region10: #{patch_embed_forward.1} parent=5 // pred_check_branch
        %88 = sbr.rel (%p85) target = $region12
      $region11: #{patch_embed_forward.1} parent=5 // pred_region
        %s89 = ssub.s32 %s7, 1
      $region12: #{patch_embed_forward.1} parent=5 // pred_fallthru
        _
      %p90 = scmp.lt.s32.totalorder %s7, 4
      // Predicated region
      $region13: #{patch_embed_forward.1} parent=5 // pred_check
        %p91 = pneg %p90
      $region14: #{patch_embed_forward.1} parent=5 // pred_check_branch
        %93 = sbr.rel (%p91) target = $region16
      $region15: #{patch_embed_forward.1} parent=5 // pred_region
        // Predicated region
        $region17: #{patch_embed_forward.1} parent=15 // pred_check
          %p94 = pneg %p41
        $region18: #{patch_embed_forward.1} parent=15 // pred_check_branch
          %96 = sbr.rel (%p94) target = $region20
        $region19: #{patch_embed_forward.1} parent=15 // pred_region
          %s97 = sand.u32 %s31, 1
          %s98 = sand.u32 %s31, 1
          %s99 = smul.addr %s98, 96
          %s100 = scalar_lea.vmem [#allocation2], %s99
          %s101 = smul.addr %s14, 24
          %s102 = sadd.s32 %s15, %s101
          %s103 = smul.addr %s102, 8
          %s104 = scalar_lea.vmem %s0, %s103
          // Predicated region
          $region21: #{patch_embed_forward.1} parent=19 // pred_check
            _
          $region22: #{patch_embed_forward.1} parent=19 // pred_check_branch
            %106 = sbr.rel (0) target = $region24
          $region23: #{patch_embed_forward.1} parent=19 // pred_region
            // Predicated region
            $region25: #{patch_embed_forward.1} parent=23 // pred_check
              _
            $region26: #{patch_embed_forward.1} parent=23 // pred_check_branch
              %108 = sbr.rel (0) target = $region28
            $region27: #{patch_embed_forward.1} parent=23 // pred_region
              // Predicated region
              $region40: #{patch_embed_forward.1} parent=27 // pred_check
                _
              $region41: #{patch_embed_forward.1} parent=27 // pred_check_branch
                %145 = sbr.rel (0) target = $region43
              $region42: #{patch_embed_forward.1} parent=27 // pred_region
                loop: start=0, step=1, limit=1
                $region44: #{patch_embed_forward.1} parent=42 // loop_pre_header
                  _
                $region45: #{patch_embed_forward.1} parent=42 // loop_header
                  %s147 = sphi 0, %s151
                  %p148 = scmp.ge.s32.totalorder %s147, 1
                  %s152 = sphi %s104, %s104
                  %s153 = sphi %s100, %s100
                $region46: #{patch_embed_forward.1} parent=42 // loop_header_branch
                  %150 = sbr.rel (%p148) target = $region50
                $region47: #{patch_embed_forward.1} parent=42 // loop_body
                  %v154 = vld [vmem:[%s152] sm:$0xff]
                  %155 = vst [vmem:[%s153] sm:$0xff] %v154
                  %v156 = vld [vmem:[%s152 + $0x10] sm:$0xff]
                  %157 = vst [vmem:[%s153 + $0x8] sm:$0xff] %v156
                  %v158 = vld [vmem:[%s152 + $0x20] sm:$0xff]
                  %159 = vst [vmem:[%s153 + $0x10] sm:$0xff] %v158
                  %v160 = vld [vmem:[%s152 + $0x30] sm:$0xff]
                  %161 = vst [vmem:[%s153 + $0x18] sm:$0xff] %v160
                  %v162 = vld [vmem:[%s152 + $0x40] sm:$0xff]
                  %163 = vst [vmem:[%s153 + $0x20] sm:$0xff] %v162
                  %v164 = vld [vmem:[%s152 + $0x50] sm:$0xff]
                  %165 = vst [vmem:[%s153 + $0x28] sm:$0xff] %v164
                  %v166 = vld [vmem:[%s152 + $0x60] sm:$0xff]
                  %167 = vst [vmem:[%s153 + $0x30] sm:$0xff] %v166
                  %v168 = vld [vmem:[%s152 + $0x70] sm:$0xff]
                  %169 = vst [vmem:[%s153 + $0x38] sm:$0xff] %v168
                  %v170 = vld [vmem:[%s152 + $0x80] sm:$0xff]
                  %171 = vst [vmem:[%s153 + $0x40] sm:$0xff] %v170
                  %v172 = vld [vmem:[%s152 + $0x90] sm:$0xff]
                  %173 = vst [vmem:[%s153 + $0x48] sm:$0xff] %v172
                  %v174 = vld [vmem:[%s152 + $0xa0] sm:$0xff]
                  %175 = vst [vmem:[%s153 + $0x50] sm:$0xff] %v174
                  %v176 = vld [vmem:[%s152 + $0xb0] sm:$0xff]
                  %177 = vst [vmem:[%s153 + $0x58] sm:$0xff] %v176
                $region48: #{patch_embed_forward.1} parent=42 // loop_footer
                  %s151 = sadd.s32 1, %s147
                $region49: #{patch_embed_forward.1} parent=42 // loop_footer_branch
                  %146 = sbr.rel target = $region45
                $region50: #{patch_embed_forward.1} parent=42 // loop_exit
                  _
              $region43: #{patch_embed_forward.1} parent=27 // pred_fallthru
                _
              // Predicated region
              $region51: #{patch_embed_forward.1} parent=27 // pred_check
                _
              $region52: #{patch_embed_forward.1} parent=27 // pred_check_branch
                %179 = sbr.rel target = $region54
              $region53: #{patch_embed_forward.1} parent=27 // pred_region
                _
              $region54: #{patch_embed_forward.1} parent=27 // pred_fallthru
                _
            $region28: #{patch_embed_forward.1} parent=23 // pred_fallthru
              _
            // Predicated region
            $region29: #{patch_embed_forward.1} parent=23 // pred_check
              _
            $region30: #{patch_embed_forward.1} parent=23 // pred_check_branch
              %110 = sbr.rel target = $region32
            $region31: #{patch_embed_forward.1} parent=23 // pred_region
              loop: start=0, step=1, limit=1
              $region33: #{patch_embed_forward.1} parent=31 // loop_pre_header
                _
              $region34: #{patch_embed_forward.1} parent=31 // loop_header
                %s113 = sphi 0, %s117
                %p114 = scmp.ge.s32.totalorder %s113, 1
                %s118 = sphi %s104, %s104
                %s119 = sphi %s100, %s100
              $region35: #{patch_embed_forward.1} parent=31 // loop_header_branch
                %116 = sbr.rel (%p114) target = $region39
              $region36: #{patch_embed_forward.1} parent=31 // loop_body
                %v120 = vld [vmem:[%s118] sm:$0xff]
                %121 = vst [vmem:[%s119] sm:$0xff] %v120
                %v122 = vld [vmem:[%s118 + $0x10] sm:$0xff]
                %123 = vst [vmem:[%s119 + $0x8] sm:$0xff] %v122
                %v124 = vld [vmem:[%s118 + $0x20] sm:$0xff]
                %125 = vst [vmem:[%s119 + $0x10] sm:$0xff] %v124
                %v126 = vld [vmem:[%s118 + $0x30] sm:$0xff]
                %127 = vst [vmem:[%s119 + $0x18] sm:$0xff] %v126
                %v128 = vld [vmem:[%s118 + $0x40] sm:$0xff]
                %129 = vst [vmem:[%s119 + $0x20] sm:$0xff] %v128
                %v130 = vld [vmem:[%s118 + $0x50] sm:$0xff]
                %131 = vst [vmem:[%s119 + $0x28] sm:$0xff] %v130
                %v132 = vld [vmem:[%s118 + $0x60] sm:$0xff]
                %133 = vst [vmem:[%s119 + $0x30] sm:$0xff] %v132
                %v134 = vld [vmem:[%s118 + $0x70] sm:$0xff]
                %135 = vst [vmem:[%s119 + $0x38] sm:$0xff] %v134
                %v136 = vld [vmem:[%s118 + $0x80] sm:$0xff]
                %137 = vst [vmem:[%s119 + $0x40] sm:$0xff] %v136
                %v138 = vld [vmem:[%s118 + $0x90] sm:$0xff]
                %139 = vst [vmem:[%s119 + $0x48] sm:$0xff] %v138
                %v140 = vld [vmem:[%s118 + $0xa0] sm:$0xff]
                %141 = vst [vmem:[%s119 + $0x50] sm:$0xff] %v140
                %v142 = vld [vmem:[%s118 + $0xb0] sm:$0xff]
                %143 = vst [vmem:[%s119 + $0x58] sm:$0xff] %v142
              $region37: #{patch_embed_forward.1} parent=31 // loop_footer
                %s117 = sadd.s32 1, %s113
              $region38: #{patch_embed_forward.1} parent=31 // loop_footer_branch
                %112 = sbr.rel target = $region34
              $region39: #{patch_embed_forward.1} parent=31 // loop_exit
                _
            $region32: #{patch_embed_forward.1} parent=23 // pred_fallthru
              _
          $region24: #{patch_embed_forward.1} parent=19 // pred_fallthru
            _
          %180 = vnop
        $region20: #{patch_embed_forward.1} parent=15 // pred_fallthru
          _
      $region16: #{patch_embed_forward.1} parent=5 // pred_fallthru
        _
      %p181 = scmp.le.s32.totalorder 1, %s7
      %p182 = scmp.lt.s32.totalorder %s7, 5
      %p183 = pnand %p181, %p182
      %p184 = pneg %p183
      // Predicated region
      $region55: #{patch_embed_forward.1} parent=5 // pred_check
        _
      $region56: #{patch_embed_forward.1} parent=5 // pred_check_branch
        %186 = sbr.rel (%p183) target = $region58
      $region57: #{patch_embed_forward.1} parent=5 // pred_region
        %s187 = ssub.s32 %s7, 1
        %s188 = sand.u32 %s34, 1
        %s189 = sand.u32 %s34, 1
        %s190 = smul.addr %s189, 96
        %s191 = scalar_lea.vmem [#allocation2], %s190
        // Predicated region
        $region59: #{patch_embed_forward.1} parent=57 // pred_check
          %p192 = pneg %p47
        $region60: #{patch_embed_forward.1} parent=57 // pred_check_branch
          %194 = sbr.rel (%p192) target = $region62
        $region61: #{patch_embed_forward.1} parent=57 // pred_region
          _
        $region62: #{patch_embed_forward.1} parent=57 // pred_fallthru
          _
        %s195 = sand.u32 %s34, 1
        %s196 = sand.u32 %s34, 1
        %s197 = smul.addr %s196, 96
        %s198 = scalar_lea.vmem [#allocation2], %s197
        %p199 = pneg %p47
        %p200 = pneg %p44
        %p201 = pneg %p75
        %p202 = pneg %p72
        %s203 = smul.u32 16, %s17
        %p204 = scmp.lt.s32.totalorder %s16, 1
        %s205 = scalar_select %p204, %s16, 1
        %p206 = scmp.lt.s32.totalorder %s203, 31
        %s207 = scalar_select %p206, %s203, 31
        %s208 = smul.addr %s205, 32
        %s209 = sadd.s32 %s207, %s208
        %s210 = smul.addr %s209, 8
        %s211 = scalar_lea.vmem %s1, %s210
        %s212 = smul.u32 16, %s17
        %p213 = scmp.lt.s32.totalorder %s16, 1
        %s214 = scalar_select %p213, %s16, 1
        %p215 = scmp.lt.s32.totalorder %s212, 31
        %s216 = scalar_select %p215, %s212, 31
        %s217 = smul.addr %s214, 32
        %s218 = sadd.s32 %s216, %s217
        %s219 = smul.addr %s218, 8
        %s220 = scalar_lea.vmem %s1, %s219
        %s221 = smul.u32 16, %s17
        %v222 = vld [vmem:[%s191] sm:$0xff]
        %v223 = vld [vmem:[%s191 + $0x8] sm:$0xff]
        %v224 = vld [vmem:[%s191 + $0x10] sm:$0xff]
        %v225 = vld [vmem:[%s191 + $0x18] sm:$0xff]
        %v226 = vld [vmem:[%s191 + $0x20] sm:$0xff]
        %v227 = vld [vmem:[%s191 + $0x28] sm:$0xff]
        %v228 = vld [vmem:[%s191 + $0x30] sm:$0xff]
        %v229 = vld [vmem:[%s191 + $0x38] sm:$0xff]
        %v230 = vld [vmem:[%s191 + $0x40] sm:$0xff]
        %v231 = vld [vmem:[%s191 + $0x48] sm:$0xff]
        %v232 = vld [vmem:[%s191 + $0x50] sm:$0xff]
        %v233 = vld [vmem:[%s191 + $0x58] sm:$0xff]
        %234 = vxpose.xlu0.b32.start [1/16] %v222, 128
        %235 = vxpose.xlu0.b32.cont [2/16] %v223, 128
        %236 = vxpose.xlu0.b32.cont [3/16] %v224, 128
        %237 = vxpose.xlu0.b32.cont [4/16] %v225, 128
        %238 = vxpose.xlu0.b32.cont [5/16] %v226, 128
        %239 = vxpose.xlu0.b32.cont [6/16] %v227, 128
        %240 = vxpose.xlu0.b32.cont [7/16] %v228, 128
        %241 = vxpose.xlu0.b32.cont [8/16] %v229, 128
        %242 = vxpose.xlu0.b32.cont [9/16] %v230, 128
        %243 = vxpose.xlu0.b32.cont [10/16] %v231, 128
        %244 = vxpose.xlu0.b32.cont [11/16] %v232, 128
        %245 = vxpose.xlu0.b32.cont [12/16] %v233, 128
        %246 = vxpose.xlu0.b32.cont [13/16] 0.0, 128
        %247 = vxpose.xlu0.b32.cont [14/16] 0.0, 128
        %248 = vxpose.xlu0.b32.cont [15/16] 0.0, 128
        %249 = vxpose.xlu0.b32.end [16/16] 0.0, 128
        %v250 = vpop.trf.xlu0
        %v251 = vpop.trf.xlu0
        %v252 = vpop.trf.xlu0
        %v253 = vpop.trf.xlu0
        %v254 = vpop.trf.xlu0
        %v255 = vpop.trf.xlu0
        %v256 = vpop.trf.xlu0
        %v257 = vpop.trf.xlu0
        %v258 = vpop.trf.xlu0
        %v259 = vpop.trf.xlu0
        %v260 = vpop.trf.xlu0
        %v261 = vpop.trf.xlu0
        %v262 = vpop.trf.xlu0
        %v263 = vpop.trf.xlu0
        %v264 = vpop.trf.xlu0
        %v265 = vpop.trf.xlu0
        %vm266 = vcmask 785408
        %267 = vst.msk [vmem:[%s220] sm:$0xff] %vm266, %v250
        %268 = vst.msk [vmem:[%s220 + $0x8] sm:$0xff] %vm266, %v251
        %269 = vst.msk [vmem:[%s220 + $0x10] sm:$0xff] %vm266, %v252
        %270 = vst.msk [vmem:[%s220 + $0x18] sm:$0xff] %vm266, %v253
        %271 = vst.msk [vmem:[%s220 + $0x20] sm:$0xff] %vm266, %v254
        %272 = vst.msk [vmem:[%s220 + $0x28] sm:$0xff] %vm266, %v255
        %273 = vst.msk [vmem:[%s220 + $0x30] sm:$0xff] %vm266, %v256
        %274 = vst.msk [vmem:[%s220 + $0x38] sm:$0xff] %vm266, %v257
        %275 = vst.msk [vmem:[%s220 + $0x40] sm:$0xff] %vm266, %v258
        %276 = vst.msk [vmem:[%s220 + $0x48] sm:$0xff] %vm266, %v259
        %277 = vst.msk [vmem:[%s220 + $0x50] sm:$0xff] %vm266, %v260
        %278 = vst.msk [vmem:[%s220 + $0x58] sm:$0xff] %vm266, %v261
        %279 = vst.msk [vmem:[%s220 + $0x60] sm:$0xff] %vm266, %v262
        %280 = vst.msk [vmem:[%s220 + $0x68] sm:$0xff] %vm266, %v263
        %281 = vst.msk [vmem:[%s220 + $0x70] sm:$0xff] %vm266, %v264
        %282 = vst.msk [vmem:[%s220 + $0x78] sm:$0xff] %vm266, %v265
        %s283 = smul.u32 16, %s17
        %p284 = scmp.lt.s32.totalorder %s16, 1
        %s285 = scalar_select %p284, %s16, 1
        %p286 = scmp.lt.s32.totalorder %s283, 31
        %s287 = scalar_select %p286, %s283, 31
        %s288 = smul.addr %s285, 32
        %s289 = sadd.s32 %s287, %s288
        %s290 = smul.addr %s289, 8
        %s291 = scalar_lea.vmem %s1, %s290
        // Predicated region
        $region63: #{patch_embed_forward.1} parent=57 // pred_check
          %p292 = pneg %p72
        $region64: #{patch_embed_forward.1} parent=57 // pred_check_branch
          %294 = sbr.rel (%p292) target = $region66
        $region65: #{patch_embed_forward.1} parent=57 // pred_region
          %s295 = smul.u32 16, %s17
        $region66: #{patch_embed_forward.1} parent=57 // pred_fallthru
          _
      $region58: #{patch_embed_forward.1} parent=5 // pred_fallthru
        _
      %p296 = scmp.le.s32.totalorder 2, %s7
      // Predicated region
      $region67: #{patch_embed_forward.1} parent=5 // pred_check
        %p297 = pneg %p296
      $region68: #{patch_embed_forward.1} parent=5 // pred_check_branch
        %299 = sbr.rel (%p297) target = $region70
      $region69: #{patch_embed_forward.1} parent=5 // pred_region
        %s300 = ssub.s32 %s7, 2
        // Predicated region
        $region71: #{patch_embed_forward.1} parent=69 // pred_check
          %p301 = pneg %p78
        $region72: #{patch_embed_forward.1} parent=69 // pred_check_branch
          %303 = sbr.rel (%p301) target = $region74
        $region73: #{patch_embed_forward.1} parent=69 // pred_region
          %s304 = smul.u32 16, %s19
          %p305 = scmp.lt.s32.totalorder %s18, 1
          %s306 = scalar_select %p305, %s18, 1
          %p307 = scmp.lt.s32.totalorder %s304, 31
          %s308 = scalar_select %p307, %s304, 31
          %s309 = smul.addr %s306, 32
          %s310 = sadd.s32 %s308, %s309
          %s311 = smul.addr %s310, 8
          %s312 = scalar_lea.vmem %s1, %s311
        $region74: #{patch_embed_forward.1} parent=69 // pred_fallthru
          _
      $region70: #{patch_embed_forward.1} parent=5 // pred_fallthru
        _
    $region6: #{patch_embed_forward.1} parent=1 // loop_footer
      %s11 = sadd.s32 1, %s7
    $region7: #{patch_embed_forward.1} parent=1 // loop_footer_branch
      %6 = sbr.rel target = $region3
    $region8: #{patch_embed_forward.1} parent=1 // loop_exit
      _

</llo_original>
